<compile_context>
chip_gen: v7x
topology: tpu7x:2x2x1
jax: 0.10.0
libtpu: 0.0.40
codegen_flags: <defaults>
</compile_context>

<pallas_src>
import functools

import jax
import jax.numpy as jnp
from jax import lax
from jax.experimental import pallas as pl
from jax.experimental.pallas import tpu as pltpu

STATE_SIZE = 4
ACTION_SIZE = 2
H1, H2, H3 = 24, 24, 12

_MAX_TILE_B = 16384                 # worst-case VMEM ~22 MiB -> safe on v7x too
_VMEM_LIMIT_BYTES = 32 * 1024 * 1024  # raises v5e's 16 MiB scoped default


def dqn_kernel(x_ref,
               w1_ref, b1_ref,
               w2_ref, b2_ref,
               w3_ref, b3_ref,
               w4_ref, b4_ref,
               out_ref):
    """One batch tile.  x_ref is row-major (TILE_B, 4); everything downstream
    is feature-major (features, TILE_B) with the batch on the lane dim."""
    x = x_ref[...]

    # Layer 1: contract the feature axis of both operands (w1 @ x^T on the
    # MXU) — the batch->lane transpose is folded into the matmul.
    h = lax.dot_general(w1_ref[...], x, (((1,), (1,)), ((), ())),
                        preferred_element_type=jnp.float32) + b1_ref[...]
    h = jnp.maximum(h, 0.0)

    h = jnp.dot(w2_ref[...], h, preferred_element_type=jnp.float32) + b2_ref[...]
    h = jnp.maximum(h, 0.0)

    h = jnp.dot(w3_ref[...], h, preferred_element_type=jnp.float32) + b3_ref[...]
    h = jnp.maximum(h, 0.0)

    q = jnp.dot(w4_ref[...], h, preferred_element_type=jnp.float32) + b4_ref[...]
    out_ref[...] = q.astype(out_ref.dtype)


def _select_tile(batch, tile_b):
    """Lane-aligned batch tile; >= 2 grid steps whenever the batch allows it."""
    tile_b = (max(128, min(int(tile_b), _MAX_TILE_B)) // 128) * 128
    if batch > tile_b:
        return tile_b                                  # grid iterates (>= 2 steps)
    if batch >= 256:
        # Whole batch would fit one block: split so ("parallel",) sharding
        # gives both v7x TensorCores work.  Result is a multiple of 128, <= batch.
        return pl.cdiv(pl.cdiv(batch, 2), 128) * 128
    return batch                                       # single exact full-array block


@functools.partial(jax.jit, static_argnames=("tile_b",))
def dqn_forward(x, params, *, tile_b=8192):
    """x: (B, STATE_SIZE) float32 (PyTorch row-major convention).

    params: PyTorch-native layout — w_i: (out, in), b_i: (out, 1).
    Returns (B, ACTION_SIZE) float32 Q-values.
    """
    B = x.shape[0]
    tile = _select_tile(B, tile_b)
    grid = (pl.cdiv(B, tile),)

    w1, b1 = params["w1"], params["b1"]
    w2, b2 = params["w2"], params["b2"]
    w3, b3 = params["w3"], params["b3"]
    w4, b4 = params["w4"], params["b4"]

    def resident(shape):
        # Same block index every grid step -> kept VMEM-resident, no re-DMA.
        return pl.BlockSpec(shape, lambda i: (0, 0))

    flops = 2 * B * (STATE_SIZE * H1 + H1 * H2 + H2 * H3 + H3 * ACTION_SIZE)
    weight_bytes = 4 * sum(int(p.size) for p in (w1, b1, w2, b2, w3, b3, w4, b4))
    bytes_accessed = B * (STATE_SIZE + ACTION_SIZE) * 4 + weight_bytes

    q_t = pl.pallas_call(
        dqn_kernel,
        out_shape=jax.ShapeDtypeStruct((ACTION_SIZE, B), jnp.float32),
        grid=grid,
        in_specs=[
            pl.BlockSpec((tile, STATE_SIZE), lambda i: (i, 0)),   # x, row-major, batch-tiled
            resident((H1, STATE_SIZE)), resident((H1, 1)),
            resident((H2, H1)),         resident((H2, 1)),
            resident((H3, H2)),         resident((H3, 1)),
            resident((ACTION_SIZE, H3)), resident((ACTION_SIZE, 1)),
        ],
        out_specs=pl.BlockSpec((ACTION_SIZE, tile), lambda i: (0, i)),
        compiler_params=pltpu.CompilerParams(
            dimension_semantics=("parallel",),
            vmem_limit_bytes=_VMEM_LIMIT_BYTES),
        cost_estimate=pl.CostEstimate(
            flops=flops, transcendentals=0, bytes_accessed=bytes_accessed),
    )(x, w1, b1, w2, b2, w3, b3, w4, b4)

    # Tiny (2, B) -> (B, 2) layout fix back to the PyTorch convention.
    return q_t.T


def init_params(key):
    """Deterministic init mimicking PyTorch Linear default (uniform +-1/sqrt(fan_in)).

    Weights stored PyTorch-native: (out, in).  Biases: (out, 1).
    """
    dims = [(STATE_SIZE, H1), (H1, H2), (H2, H3), (H3, ACTION_SIZE)]
    params = {}
    for i, (fan_in, fan_out) in enumerate(dims, start=1):
        key, kw, kb = jax.random.split(key, 3)
        bound = 1.0 / jnp.sqrt(jnp.float32(fan_in))
        params[f"w{i}"] = jax.random.uniform(
            kw, (fan_out, fan_in), jnp.float32, -bound, bound)
        params[f"b{i}"] = jax.random.uniform(
            kb, (fan_out, 1), jnp.float32, -bound, bound)
    return params


def dqn_reference(x, params):
    """Pure-JAX reference (row-major, PyTorch semantics) for correctness checking."""
    h = jnp.maximum(x @ params["w1"].T + params["b1"].T, 0.0)
    h = jnp.maximum(h @ params["w2"].T + params["b2"].T, 0.0)
    h = jnp.maximum(h @ params["w3"].T + params["b3"].T, 0.0)
    return h @ params["w4"].T + params["b4"].T


if __name__ == "__main__":
    key = jax.random.PRNGKey(0)
    key, kx = jax.random.split(key)

    batch = 8
    x = jax.random.normal(kx, (batch, STATE_SIZE), jnp.float32)
    params = init_params(key)

    q = jax.block_until_ready(dqn_forward(x, params))
    q_ref = dqn_reference(x, params)
    assert q.shape == (batch, ACTION_SIZE)
    assert jnp.allclose(q, q_ref, atol=1e-5, rtol=1e-5), "mismatch vs reference"

    # Non-lane-aligned batch: default tile -> 2 grid steps with a partial
    # (OOB-masked) edge block.
    key, kx2 = jax.random.split(key)
    x_big = jax.random.normal(kx2, (300, STATE_SIZE), jnp.float32)
    q_big = jax.block_until_ready(dqn_forward(x_big, params))
    assert q_big.shape == (300, ACTION_SIZE)
    assert jnp.allclose(q_big, dqn_reference(x_big, params), atol=1e-5, rtol=1e-5)

    # Explicit small, non-128-aligned tile request -> rounded to 128, 3 steps.
    q_big2 = jax.block_until_ready(dqn_forward(x_big, params, tile_b=130))
    assert jnp.allclose(q_big2, dqn_reference(x_big, params), atol=1e-5, rtol=1e-5)

    print("KERNEL_OK")
</pallas_src>

<mosaic_0001>
module attributes {stable_mosaic.version = 11 : i64} {
  func.func @dqn_kernel(%arg0: i32, %arg1: memref<8x4xf32, #tpu.memory_space<vmem>>, %arg2: memref<24x4xf32, #tpu.memory_space<vmem>>, %arg3: memref<24x1xf32, #tpu.memory_space<vmem>>, %arg4: memref<24x24xf32, #tpu.memory_space<vmem>>, %arg5: memref<24x1xf32, #tpu.memory_space<vmem>>, %arg6: memref<12x24xf32, #tpu.memory_space<vmem>>, %arg7: memref<12x1xf32, #tpu.memory_space<vmem>>, %arg8: memref<2x12xf32, #tpu.memory_space<vmem>>, %arg9: memref<2x1xf32, #tpu.memory_space<vmem>>, %arg10: memref<2x8xf32, #tpu.memory_space<vmem>>) attributes {dimension_semantics = [#tpu.dimension_semantics<parallel>], iteration_bounds = array<i64: 1>, scalar_prefetch = 0 : i64, scratch_operands = 0 : i64, tpu.core_type = #tpu.core_type<tc>, window_params = [{transform_indices = @transform_0, window_bounds = array<i64: 8, 4>}, {pipeline_mode = #tpu.pipeline_mode<synchronous>, transform_indices = @transform_1, window_bounds = array<i64: 24, 4>}, {pipeline_mode = #tpu.pipeline_mode<synchronous>, transform_indices = @transform_2, window_bounds = array<i64: 24, 1>}, {pipeline_mode = #tpu.pipeline_mode<synchronous>, transform_indices = @transform_3, window_bounds = array<i64: 24, 24>}, {pipeline_mode = #tpu.pipeline_mode<synchronous>, transform_indices = @transform_4, window_bounds = array<i64: 24, 1>}, {pipeline_mode = #tpu.pipeline_mode<synchronous>, transform_indices = @transform_5, window_bounds = array<i64: 12, 24>}, {pipeline_mode = #tpu.pipeline_mode<synchronous>, transform_indices = @transform_6, window_bounds = array<i64: 12, 1>}, {pipeline_mode = #tpu.pipeline_mode<synchronous>, transform_indices = @transform_7, window_bounds = array<i64: 2, 12>}, {pipeline_mode = #tpu.pipeline_mode<synchronous>, transform_indices = @transform_8, window_bounds = array<i64: 2, 1>}, {transform_indices = @transform_9, window_bounds = array<i64: 2, 8>}]} {
    %c0 = arith.constant 0 : index
    %c0_0 = arith.constant 0 : index
    %0 = vector.load %arg1[%c0, %c0_0] : memref<8x4xf32, #tpu.memory_space<vmem>>, vector<8x4xf32>
    %c0_1 = arith.constant 0 : index
    %c0_2 = arith.constant 0 : index
    %1 = vector.load %arg2[%c0_1, %c0_2] : memref<24x4xf32, #tpu.memory_space<vmem>>, vector<24x4xf32>
    %cst = arith.constant dense<0.000000e+00> : vector<24x8xf32>
    %2 = tpu.matmul %1, %0, %cst {dimension_numbers = #tpu.dot_dimension_numbers<[1], [1], [0], [0], [0, 0, 1, 0], [], []>} : vector<24x4xf32>, vector<8x4xf32>, vector<24x8xf32> -> vector<24x8xf32>
    %c0_3 = arith.constant 0 : index
    %c0_4 = arith.constant 0 : index
    %3 = vector.load %arg3[%c0_3, %c0_4] : memref<24x1xf32, #tpu.memory_space<vmem>>, vector<24x1xf32>
    %4 = vector.broadcast %3 : vector<24x1xf32> to vector<24x8xf32>
    %5 = arith.addf %2, %4 : vector<24x8xf32>
    %cst_5 = arith.constant 0.000000e+00 : f32
    %6 = vector.broadcast %cst_5 : f32 to vector<24x8xf32>
    %7 = arith.maximumf %5, %6 : vector<24x8xf32>
    %c0_6 = arith.constant 0 : index
    %c0_7 = arith.constant 0 : index
    %8 = vector.load %arg4[%c0_6, %c0_7] : memref<24x24xf32, #tpu.memory_space<vmem>>, vector<24x24xf32>
    %cst_8 = arith.constant dense<0.000000e+00> : vector<24x8xf32>
    %9 = tpu.matmul %8, %7, %cst_8 {dimension_numbers = #tpu.dot_dimension_numbers<[1], [0], [0], [1], [0, 0, 1, 1], [], []>} : vector<24x24xf32>, vector<24x8xf32>, vector<24x8xf32> -> vector<24x8xf32>
    %c0_9 = arith.constant 0 : index
    %c0_10 = arith.constant 0 : index
    %10 = vector.load %arg5[%c0_9, %c0_10] : memref<24x1xf32, #tpu.memory_space<vmem>>, vector<24x1xf32>
    %11 = vector.broadcast %10 : vector<24x1xf32> to vector<24x8xf32>
    %12 = arith.addf %9, %11 : vector<24x8xf32>
    %cst_11 = arith.constant 0.000000e+00 : f32
    %13 = vector.broadcast %cst_11 : f32 to vector<24x8xf32>
    %14 = arith.maximumf %12, %13 : vector<24x8xf32>
    %c0_12 = arith.constant 0 : index
    %c0_13 = arith.constant 0 : index
    %15 = vector.load %arg6[%c0_12, %c0_13] : memref<12x24xf32, #tpu.memory_space<vmem>>, vector<12x24xf32>
    %cst_14 = arith.constant dense<0.000000e+00> : vector<12x8xf32>
    %16 = tpu.matmul %15, %14, %cst_14 {dimension_numbers = #tpu.dot_dimension_numbers<[1], [0], [0], [1], [0, 0, 1, 1], [], []>} : vector<12x24xf32>, vector<24x8xf32>, vector<12x8xf32> -> vector<12x8xf32>
    %c0_15 = arith.constant 0 : index
    %c0_16 = arith.constant 0 : index
    %17 = vector.load %arg7[%c0_15, %c0_16] : memref<12x1xf32, #tpu.memory_space<vmem>>, vector<12x1xf32>
    %18 = vector.broadcast %17 : vector<12x1xf32> to vector<12x8xf32>
    %19 = arith.addf %16, %18 : vector<12x8xf32>
    %cst_17 = arith.constant 0.000000e+00 : f32
    %20 = vector.broadcast %cst_17 : f32 to vector<12x8xf32>
    %21 = arith.maximumf %19, %20 : vector<12x8xf32>
    %c0_18 = arith.constant 0 : index
    %c0_19 = arith.constant 0 : index
    %22 = vector.load %arg8[%c0_18, %c0_19] : memref<2x12xf32, #tpu.memory_space<vmem>>, vector<2x12xf32>
    %cst_20 = arith.constant dense<0.000000e+00> : vector<2x8xf32>
    %23 = tpu.matmul %22, %21, %cst_20 {dimension_numbers = #tpu.dot_dimension_numbers<[1], [0], [0], [1], [0, 0, 1, 1], [], []>} : vector<2x12xf32>, vector<12x8xf32>, vector<2x8xf32> -> vector<2x8xf32>
    %c0_21 = arith.constant 0 : index
    %c0_22 = arith.constant 0 : index
    %24 = vector.load %arg9[%c0_21, %c0_22] : memref<2x1xf32, #tpu.memory_space<vmem>>, vector<2x1xf32>
    %25 = vector.broadcast %24 : vector<2x1xf32> to vector<2x8xf32>
    %26 = arith.addf %23, %25 : vector<2x8xf32>
    %c0_23 = arith.constant 0 : index
    %c0_24 = arith.constant 0 : index
    %27 = vector.load %arg10[%c0_23, %c0_24] : memref<2x8xf32, #tpu.memory_space<vmem>>, vector<2x8xf32>
    tpu.vector_store %arg10[%c0_23, %c0_24], %26 {strides = array<i32>} : memref<2x8xf32, #tpu.memory_space<vmem>>, vector<2x8xf32>,
    return
  }
  func.func @transform_0(%arg0: i32) -> (i32, i32) {
    %c0_i32 = arith.constant 0 : i32
    %c0_i32_0 = arith.constant 0 : i32
    return %arg0, %c0_i32 : i32, i32
  }
  func.func @transform_1(%arg0: i32) -> (i32, i32) {
    %c0_i32 = arith.constant 0 : i32
    %c0_i32_0 = arith.constant 0 : i32
    %c0_i32_1 = arith.constant 0 : i32
    return %c0_i32, %c0_i32_0 : i32, i32
  }
  func.func @transform_2(%arg0: i32) -> (i32, i32) {
    %c0_i32 = arith.constant 0 : i32
    %c0_i32_0 = arith.constant 0 : i32
    %c0_i32_1 = arith.constant 0 : i32
    return %c0_i32, %c0_i32_0 : i32, i32
  }
  func.func @transform_3(%arg0: i32) -> (i32, i32) {
    %c0_i32 = arith.constant 0 : i32
    %c0_i32_0 = arith.constant 0 : i32
    %c0_i32_1 = arith.constant 0 : i32
    return %c0_i32, %c0_i32_0 : i32, i32
  }
  func.func @transform_4(%arg0: i32) -> (i32, i32) {
    %c0_i32 = arith.constant 0 : i32
    %c0_i32_0 = arith.constant 0 : i32
    %c0_i32_1 = arith.constant 0 : i32
    return %c0_i32, %c0_i32_0 : i32, i32
  }
  func.func @transform_5(%arg0: i32) -> (i32, i32) {
    %c0_i32 = arith.constant 0 : i32
    %c0_i32_0 = arith.constant 0 : i32
    %c0_i32_1 = arith.constant 0 : i32
    return %c0_i32, %c0_i32_0 : i32, i32
  }
  func.func @transform_6(%arg0: i32) -> (i32, i32) {
    %c0_i32 = arith.constant 0 : i32
    %c0_i32_0 = arith.constant 0 : i32
    %c0_i32_1 = arith.constant 0 : i32
    return %c0_i32, %c0_i32_0 : i32, i32
  }
  func.func @transform_7(%arg0: i32) -> (i32, i32) {
    %c0_i32 = arith.constant 0 : i32
    %c0_i32_0 = arith.constant 0 : i32
    %c0_i32_1 = arith.constant 0 : i32
    return %c0_i32, %c0_i32_0 : i32, i32
  }
  func.func @transform_8(%arg0: i32) -> (i32, i32) {
    %c0_i32 = arith.constant 0 : i32
    %c0_i32_0 = arith.constant 0 : i32
    %c0_i32_1 = arith.constant 0 : i32
    return %c0_i32, %c0_i32_0 : i32, i32
  }
  func.func @transform_9(%arg0: i32) -> (i32, i32) {
    %c0_i32 = arith.constant 0 : i32
    %c0_i32_0 = arith.constant 0 : i32
    return %c0_i32, %arg0 : i32, i32
  }
}

</mosaic_0001>

<llo_original>
// kernel: dqn_forward.1
$region0: #{dqn_forward.1}
  #allocation0 [shape = 'u32[]', space=smem, size = 0x4, offset = 0x4, fixed_abs, tag = 'smem constant byte address 0x4 - core index']
  #allocation1 [shape = 'u32[144,128]{1,0:T(1,128)}', space=vmem, size = 0x12000, scoped, tag = 'internal scratch']
  %s0 = inlined_call_operand.vmem [shape: f32[8,4], index: 0, kind: input, shape index: {}]
  %s1 = inlined_call_operand.vmem [shape: f32[24,4], index: 1, kind: input, shape index: {}]
  %s2 = inlined_call_operand.vmem [shape: f32[24,1], index: 2, kind: input, shape index: {}]
  %s3 = inlined_call_operand.vmem [shape: f32[24,24], index: 3, kind: input, shape index: {}]
  %s4 = inlined_call_operand.vmem [shape: f32[24,1], index: 4, kind: input, shape index: {}]
  %s5 = inlined_call_operand.vmem [shape: f32[12,24], index: 5, kind: input, shape index: {}]
  %s6 = inlined_call_operand.vmem [shape: f32[12,1], index: 6, kind: input, shape index: {}]
  %s7 = inlined_call_operand.vmem [shape: f32[2,12], index: 7, kind: input, shape index: {}]
  %s8 = inlined_call_operand.vmem [shape: f32[2,1], index: 8, kind: input, shape index: {}]
  %s9 = inlined_call_operand.hbm [shape: f32[2,8], index: 9, kind: output, shape index: {}]
  %s10 = sld [smem:[#allocation0]]
  $region46: #{dqn_forward.1} parent=0
    _
  %s12 = ssub.s32 1, %s10
  %s13 = scalar_select 0, %s12, %s10
  $region1: #{dqn_forward.1} parent=0
    #allocation2 [shape = 'u8[1024]{0}', space=vmem, size = 0x400, scoped, tag = 'output window, operand 0, single buffered']
    #allocation3 [shape = 's32[1]{0}', space=sflag, size = 0x4, scoped, tag = 'scoped memory for dqn_forward.1']
    %14 = vsyncpa [#allocation3], 0
    // Predicated region
    $region2: #{dqn_forward.1} parent=1 // pred_check
      _
    $region3: #{dqn_forward.1} parent=1 // pred_check_branch
      %16 = sbr.rel (0) target = $region5
    $region4: #{dqn_forward.1} parent=1 // pred_region
      _
    $region5: #{dqn_forward.1} parent=1 // pred_fallthru
      _
    // Predicated region
    $region6: #{dqn_forward.1} parent=1 // pred_check
      _
    $region7: #{dqn_forward.1} parent=1 // pred_check_branch
      %18 = sbr.rel (0) target = $region9
    $region8: #{dqn_forward.1} parent=1 // pred_region
      _
    $region9: #{dqn_forward.1} parent=1 // pred_fallthru
      _
    // Predicated region
    $region10: #{dqn_forward.1} parent=1 // pred_check
      _
    $region11: #{dqn_forward.1} parent=1 // pred_check_branch
      %20 = sbr.rel (0) target = $region13
    $region12: #{dqn_forward.1} parent=1 // pred_region
      _
    $region13: #{dqn_forward.1} parent=1 // pred_fallthru
      _
    // Predicated region
    $region14: #{dqn_forward.1} parent=1 // pred_check
      _
    $region15: #{dqn_forward.1} parent=1 // pred_check_branch
      %22 = sbr.rel (0) target = $region17
    $region16: #{dqn_forward.1} parent=1 // pred_region
      _
    $region17: #{dqn_forward.1} parent=1 // pred_fallthru
      _
    // Predicated region
    $region18: #{dqn_forward.1} parent=1 // pred_check
      _
    $region19: #{dqn_forward.1} parent=1 // pred_check_branch
      %24 = sbr.rel (0) target = $region21
    $region20: #{dqn_forward.1} parent=1 // pred_region
      _
    $region21: #{dqn_forward.1} parent=1 // pred_fallthru
      _
    // Predicated region
    $region22: #{dqn_forward.1} parent=1 // pred_check
      _
    $region23: #{dqn_forward.1} parent=1 // pred_check_branch
      %26 = sbr.rel (0) target = $region25
    $region24: #{dqn_forward.1} parent=1 // pred_region
      _
    $region25: #{dqn_forward.1} parent=1 // pred_fallthru
      _
    // Predicated region
    $region26: #{dqn_forward.1} parent=1 // pred_check
      _
    $region27: #{dqn_forward.1} parent=1 // pred_check_branch
      %28 = sbr.rel (0) target = $region29
    $region28: #{dqn_forward.1} parent=1 // pred_region
      _
    $region29: #{dqn_forward.1} parent=1 // pred_fallthru
      _
    // Predicated region
    $region30: #{dqn_forward.1} parent=1 // pred_check
      _
    $region31: #{dqn_forward.1} parent=1 // pred_check_branch
      %30 = sbr.rel (0) target = $region33
    $region32: #{dqn_forward.1} parent=1 // pred_region
      _
    $region33: #{dqn_forward.1} parent=1 // pred_fallthru
      _
    // Predicated region
    $region34: #{dqn_forward.1} parent=1 // pred_check
      _
    $region35: #{dqn_forward.1} parent=1 // pred_check_branch
      %32 = sbr.rel (0) target = $region37
    $region36: #{dqn_forward.1} parent=1 // pred_region
      _
    $region37: #{dqn_forward.1} parent=1 // pred_fallthru
      _
    %v33 = vld [vmem:[%s0] sm:$0xff]
    %v34 = vld [vmem:[%s1] sm:$0xff]
    %v35 = vld [vmem:[%s1 + $0x8] sm:$0xff]
    %v36 = vld [vmem:[%s1 + $0x10] sm:$0xff]
    %v37 = vld [vmem:[%s2] sm:$0xff]
    %v38 = vld [vmem:[%s2 + $0x8] sm:$0xff]
    %v39 = vld [vmem:[%s2 + $0x10] sm:$0xff]
    %41 = vset.pattern.permute.xlu0 0
    %42 = vperm.xlu0 %41, %v37
    %v43 = vpop.permute.xlu0 %42
    %46 = vset.pattern.permute.xlu0 0
    %47 = vperm.xlu0 %46, %v38
    %v48 = vpop.permute.xlu0 %47
    %51 = vset.pattern.permute.xlu0 0
    %52 = vperm.xlu0 %51, %v39
    %v53 = vpop.permute.xlu0 %52
    %vm55 = vcmask 31744
    %v57 = vsel %vm55, %v34, 0
    %v60 = vsel %vm55, %v35, 0
    %v63 = vsel %vm55, %v36, 0
    %v66 = vsel %vm55, %v33, 0
    %68 = vmatprep.subr.mxu0 0.0
    %69 = vmatpush1.xpose.msra.mxu0 %v66
    %70 = vmatprep.subr.mxu0 0.0
    %71 = vmatpush1.xpose.msra.mxu0 0.0
    %72 = vmatprep.subr.mxu0 0.0
    %73 = vmatpush1.xpose.msra.mxu0 0.0
    %74 = vmatprep.subr.mxu0 0.0
    %75 = vmatpush1.xpose.msra.mxu0 0.0
    %76 = vmatprep.subr.mxu0 0.0
    %77 = vmatpush1.xpose.msra.mxu0 0.0
    %78 = vmatprep.subr.mxu0 0.0
    %79 = vmatpush1.xpose.msra.mxu0 0.0
    %80 = vmatprep.subr.mxu0 0.0
    %81 = vmatpush1.xpose.msra.mxu0 0.0
    %82 = vmatprep.subr.mxu0 0.0
    %83 = vmatpush1.xpose.msra.mxu0 0.0
    %84 = vmatprep.subr.mxu0 0.0
    %85 = vmatpush1.xpose.msra.mxu0 0.0
    %86 = vmatprep.subr.mxu0 0.0
    %87 = vmatpush1.xpose.msra.mxu0 0.0
    %88 = vmatprep.subr.mxu0 0.0
    %89 = vmatpush1.xpose.msra.mxu0 0.0
    %90 = vmatprep.subr.mxu0 0.0
    %91 = vmatpush1.xpose.msra.mxu0 0.0
    %92 = vmatprep.subr.mxu0 0.0
    %93 = vmatpush1.xpose.msra.mxu0 0.0
    %94 = vmatprep.subr.mxu0 0.0
    %95 = vmatpush1.xpose.msra.mxu0 0.0
    %96 = vmatprep.subr.mxu0 0.0
    %97 = vmatpush1.xpose.msra.mxu0 0.0
    %98 = vmatprep.subr.mxu0 0.0
    %99 = vmatpush1.xpose.msra.mxu0 0.0
    %100 = vmatprep.subr.mxu0 0.0
    %101 = vmatpush1.xpose.msra.mxu0 0.0
    %102 = vmatprep.subr.mxu0 0.0
    %103 = vmatpush1.xpose.msra.mxu0 0.0
    %104 = vmatprep.subr.mxu0 0.0
    %105 = vmatpush1.xpose.msra.mxu0 0.0
    %106 = vmatprep.subr.mxu0 0.0
    %107 = vmatpush1.xpose.msra.mxu0 0.0
    %108 = vmatprep.subr.mxu0 0.0
    %109 = vmatpush1.xpose.msra.mxu0 0.0
    %110 = vmatprep.subr.mxu0 0.0
    %111 = vmatpush1.xpose.msra.mxu0 0.0
    %112 = vmatprep.subr.mxu0 0.0
    %113 = vmatpush1.xpose.msra.mxu0 0.0
    %114 = vmatprep.subr.mxu0 0.0
    %115 = vmatpush1.xpose.msra.mxu0 0.0
    %116 = vmatprep.subr.mxu0 0.0
    %117 = vmatpush1.xpose.msra.mxu0 0.0
    %118 = vmatprep.subr.mxu0 0.0
    %119 = vmatpush1.xpose.msra.mxu0 0.0
    %120 = vmatprep.subr.mxu0 0.0
    %121 = vmatpush1.xpose.msra.mxu0 0.0
    %122 = vmatprep.subr.mxu0 0.0
    %123 = vmatpush1.xpose.msra.mxu0 0.0
    %124 = vmatprep.subr.mxu0 0.0
    %125 = vmatpush1.xpose.msra.mxu0 0.0
    %126 = vmatprep.subr.mxu0 0.0
    %127 = vmatpush1.xpose.msra.mxu0 0.0
    %128 = vmatprep.subr.mxu0 0.0
    %129 = vmatpush1.xpose.msra.mxu0 0.0
    %130 = vmatprep.subr.mxu0 0.0
    %131 = vmatpush1.xpose.msra.mxu0 0.0
    %132 = vmatprep.mubr.f32.mxu0 0.0
    %133 = vmatmul.mubr.f32.gmra.mrb[0].mxu0 %v57
    %v134 = vpop.f32.mrb[0].mxu0
    %v135 = vadd.f32 %v43, %v134
    %v136 = vpop.f32.mrb[0].mxu0
    %137 = vmatprep.mubr.f32.mxu0 0.0
    %138 = vmatmul.mubr.f32.gmra.mrb[0].mxu0 %v60
    %v139 = vpop.f32.mrb[0].mxu0
    %v140 = vadd.f32 %v48, %v139
    %v141 = vpop.f32.mrb[0].mxu0
    %142 = vmatprep.mubr.f32.mxu0 0.0
    %143 = vmatmul.mubr.f32.gmra.mrb[0].mxu0 %v63
    %v144 = vpop.f32.mrb[0].mxu0
    %v145 = vadd.f32 %v53, %v144
    %v146 = vpop.f32.mrb[0].mxu0
    %147 = vdwg.mxu0
    %v148 = vmax.f32 %v135, 0.0
    %v149 = vmax.f32 %v140, 0.0
    %v150 = vmax.f32 %v145, 0.0
    %v151 = vld [vmem:[%s3] sm:$0xff]
    %v152 = vld [vmem:[%s3 + $0x8] sm:$0xff]
    %v153 = vld [vmem:[%s3 + $0x10] sm:$0xff]
    %v154 = vld [vmem:[%s4] sm:$0xff]
    %v155 = vld [vmem:[%s4 + $0x8] sm:$0xff]
    %v156 = vld [vmem:[%s4 + $0x10] sm:$0xff]
    %158 = vset.pattern.permute.xlu0 0
    %159 = vperm.xlu0 %158, %v154
    %v160 = vpop.permute.xlu0 %159
    %163 = vset.pattern.permute.xlu0 0
    %164 = vperm.xlu0 %163, %v155
    %v165 = vpop.permute.xlu0 %164
    %168 = vset.pattern.permute.xlu0 0
    %169 = vperm.xlu0 %168, %v156
    %v170 = vpop.permute.xlu0 %169
    %vm172 = vcmask 195584
    %v174 = vsel %vm172, %v151, 0
    %v177 = vsel %vm172, %v152, 0
    %v180 = vsel %vm172, %v153, 0
    %182 = vmatprep.subr.mxu0 0.0
    %183 = vmatpush1.msra.mxu0 %v148
    %184 = vmatprep.subr.mxu0 0.0
    %185 = vmatpush1.msra.mxu0 %v149
    %186 = vmatprep.subr.mxu0 0.0
    %187 = vmatpush1.msra.mxu0 %v150
    %188 = vmatprep.subr.mxu0 0.0
    %189 = vmatpush1.msra.mxu0 0.0
    %190 = vmatprep.subr.mxu0 0.0
    %191 = vmatpush1.msra.mxu0 0.0
    %192 = vmatprep.subr.mxu0 0.0
    %193 = vmatpush1.msra.mxu0 0.0
    %194 = vmatprep.subr.mxu0 0.0
    %195 = vmatpush1.msra.mxu0 0.0
    %196 = vmatprep.subr.mxu0 0.0
    %197 = vmatpush1.msra.mxu0 0.0
    %198 = vmatprep.subr.mxu0 0.0
    %199 = vmatpush1.msra.mxu0 0.0
    %200 = vmatprep.subr.mxu0 0.0
    %201 = vmatpush1.msra.mxu0 0.0
    %202 = vmatprep.subr.mxu0 0.0
    %203 = vmatpush1.msra.mxu0 0.0
    %204 = vmatprep.subr.mxu0 0.0
    %205 = vmatpush1.msra.mxu0 0.0
    %206 = vmatprep.subr.mxu0 0.0
    %207 = vmatpush1.msra.mxu0 0.0
    %208 = vmatprep.subr.mxu0 0.0
    %209 = vmatpush1.msra.mxu0 0.0
    %210 = vmatprep.subr.mxu0 0.0
    %211 = vmatpush1.msra.mxu0 0.0
    %212 = vmatprep.subr.mxu0 0.0
    %213 = vmatpush1.msra.mxu0 0.0
    %214 = vmatprep.subr.mxu0 0.0
    %215 = vmatpush1.msra.mxu0 0.0
    %216 = vmatprep.subr.mxu0 0.0
    %217 = vmatpush1.msra.mxu0 0.0
    %218 = vmatprep.subr.mxu0 0.0
    %219 = vmatpush1.msra.mxu0 0.0
    %220 = vmatprep.subr.mxu0 0.0
    %221 = vmatpush1.msra.mxu0 0.0
    %222 = vmatprep.subr.mxu0 0.0
    %223 = vmatpush1.msra.mxu0 0.0
    %224 = vmatprep.subr.mxu0 0.0
    %225 = vmatpush1.msra.mxu0 0.0
    %226 = vmatprep.subr.mxu0 0.0
    %227 = vmatpush1.msra.mxu0 0.0
    %228 = vmatprep.subr.mxu0 0.0
    %229 = vmatpush1.msra.mxu0 0.0
    %230 = vmatprep.subr.mxu0 0.0
    %231 = vmatpush1.msra.mxu0 0.0
    %232 = vmatprep.subr.mxu0 0.0
    %233 = vmatpush1.msra.mxu0 0.0
    %234 = vmatprep.subr.mxu0 0.0
    %235 = vmatpush1.msra.mxu0 0.0
    %236 = vmatprep.subr.mxu0 0.0
    %237 = vmatpush1.msra.mxu0 0.0
    %238 = vmatprep.subr.mxu0 0.0
    %239 = vmatpush1.msra.mxu0 0.0
    %240 = vmatprep.subr.mxu0 0.0
    %241 = vmatpush1.msra.mxu0 0.0
    %242 = vmatprep.subr.mxu0 0.0
    %243 = vmatpush1.msra.mxu0 0.0
    %244 = vmatprep.subr.mxu0 0.0
    %245 = vmatpush1.msra.mxu0 0.0
    %246 = vmatprep.mubr.f32.mxu0 0.0
    %247 = vmatmul.mubr.f32.gmra.mrb[0].mxu0 %v174
    %v248 = vpop.f32.mrb[0].mxu0
    %v249 = vadd.f32 %v160, %v248
    %v250 = vpop.f32.mrb[0].mxu0
    %251 = vmatprep.mubr.f32.mxu0 0.0
    %252 = vmatmul.mubr.f32.gmra.mrb[0].mxu0 %v177
    %v253 = vpop.f32.mrb[0].mxu0
    %v254 = vadd.f32 %v165, %v253
    %v255 = vpop.f32.mrb[0].mxu0
    %256 = vmatprep.mubr.f32.mxu0 0.0
    %257 = vmatmul.mubr.f32.gmra.mrb[0].mxu0 %v180
    %v258 = vpop.f32.mrb[0].mxu0
    %v259 = vadd.f32 %v170, %v258
    %v260 = vpop.f32.mrb[0].mxu0
    %261 = vdwg.mxu0
    %v262 = vmax.f32 %v249, 0.0
    %v263 = vmax.f32 %v254, 0.0
    %v264 = vmax.f32 %v259, 0.0
    %v265 = vld [vmem:[%s5] sm:$0xff]
    %v266 = vld [vmem:[%s5 + $0x8] sm:$0xf]
    %v267 = vld [vmem:[%s6] sm:$0xff]
    %v268 = vld [vmem:[%s6 + $0x8] sm:$0xf]
    %270 = vset.pattern.permute.xlu0 0
    %271 = vperm.xlu0 %270, %v267
    %v272 = vpop.permute.xlu0 %271
    %275 = vset.pattern.permute.xlu0 0
    %276 = vperm.xlu0 %275, %v268
    %v277 = vpop.permute.xlu0 %276
    %v280 = vsel %vm172, %v265, 0
    %v283 = vsel %vm172, %v266, 0
    %285 = vmatprep.subr.mxu0 0.0
    %286 = vmatpush1.msra.mxu0 %v262
    %287 = vmatprep.subr.mxu0 0.0
    %288 = vmatpush1.msra.mxu0 %v263
    %289 = vmatprep.subr.mxu0 0.0
    %290 = vmatpush1.msra.mxu0 %v264
    %291 = vmatprep.subr.mxu0 0.0
    %292 = vmatpush1.msra.mxu0 0.0
    %293 = vmatprep.subr.mxu0 0.0
    %294 = vmatpush1.msra.mxu0 0.0
    %295 = vmatprep.subr.mxu0 0.0
    %296 = vmatpush1.msra.mxu0 0.0
    %297 = vmatprep.subr.mxu0 0.0
    %298 = vmatpush1.msra.mxu0 0.0
    %299 = vmatprep.subr.mxu0 0.0
    %300 = vmatpush1.msra.mxu0 0.0
    %301 = vmatprep.subr.mxu0 0.0
    %302 = vmatpush1.msra.mxu0 0.0
    %303 = vmatprep.subr.mxu0 0.0
    %304 = vmatpush1.msra.mxu0 0.0
    %305 = vmatprep.subr.mxu0 0.0
    %306 = vmatpush1.msra.mxu0 0.0
    %307 = vmatprep.subr.mxu0 0.0
    %308 = vmatpush1.msra.mxu0 0.0
    %309 = vmatprep.subr.mxu0 0.0
    %310 = vmatpush1.msra.mxu0 0.0
    %311 = vmatprep.subr.mxu0 0.0
    %312 = vmatpush1.msra.mxu0 0.0
    %313 = vmatprep.subr.mxu0 0.0
    %314 = vmatpush1.msra.mxu0 0.0
    %315 = vmatprep.subr.mxu0 0.0
    %316 = vmatpush1.msra.mxu0 0.0
    %317 = vmatprep.subr.mxu0 0.0
    %318 = vmatpush1.msra.mxu0 0.0
    %319 = vmatprep.subr.mxu0 0.0
    %320 = vmatpush1.msra.mxu0 0.0
    %321 = vmatprep.subr.mxu0 0.0
    %322 = vmatpush1.msra.mxu0 0.0
    %323 = vmatprep.subr.mxu0 0.0
    %324 = vmatpush1.msra.mxu0 0.0
    %325 = vmatprep.subr.mxu0 0.0
    %326 = vmatpush1.msra.mxu0 0.0
    %327 = vmatprep.subr.mxu0 0.0
    %328 = vmatpush1.msra.mxu0 0.0
    %329 = vmatprep.subr.mxu0 0.0
    %330 = vmatpush1.msra.mxu0 0.0
    %331 = vmatprep.subr.mxu0 0.0
    %332 = vmatpush1.msra.mxu0 0.0
    %333 = vmatprep.subr.mxu0 0.0
    %334 = vmatpush1.msra.mxu0 0.0
    %335 = vmatprep.subr.mxu0 0.0
    %336 = vmatpush1.msra.mxu0 0.0
    %337 = vmatprep.subr.mxu0 0.0
    %338 = vmatpush1.msra.mxu0 0.0
    %339 = vmatprep.subr.mxu0 0.0
    %340 = vmatpush1.msra.mxu0 0.0
    %341 = vmatprep.subr.mxu0 0.0
    %342 = vmatpush1.msra.mxu0 0.0
    %343 = vmatprep.subr.mxu0 0.0
    %344 = vmatpush1.msra.mxu0 0.0
    %345 = vmatprep.subr.mxu0 0.0
    %346 = vmatpush1.msra.mxu0 0.0
    %347 = vmatprep.subr.mxu0 0.0
    %348 = vmatpush1.msra.mxu0 0.0
    %349 = vmatprep.mubr.f32.mxu0 0.0
    %350 = vmatmul.mubr.f32.gmra.mrb[0].mxu0 %v280
    %v351 = vpop.f32.mrb[0].mxu0
    %v352 = vadd.f32 %v272, %v351
    %v353 = vpop.f32.mrb[0].mxu0
    %354 = vmatprep.mubr.f32.mxu0 0.0
    %355 = vmatmul.mubr.f32.gmra.mrb[0].mxu0 %v283
    %v356 = vpop.f32.mrb[0].mxu0
    %v357 = vadd.f32 %v277, %v356
    %v358 = vpop.f32.mrb[0].mxu0
    %359 = vdwg.mxu0
    %v360 = vmax.f32 %v352, 0.0
    %v361 = vmax.f32 %v357, 0.0
    %v362 = vld [vmem:[%s7] sm:$0x3]
    %v363 = vld [vmem:[%s8] sm:$0x3]
    %365 = vset.pattern.permute.xlu0 0
    %366 = vperm.xlu0 %365, %v363
    %v367 = vpop.permute.xlu0 %366
    %vm369 = vcmask 97280
    %v371 = vsel %vm369, %v362, 0
    %vm373 = vcmask 1043456
    %v375 = vsel %vm373, %v361, 0
    %377 = vmatprep.subr.mxu0 0.0
    %378 = vmatpush1.msra.mxu0 %v360
    %379 = vmatprep.subr.mxu0 0.0
    %380 = vmatpush1.msra.mxu0 %v375
    %381 = vmatprep.subr.mxu0 0.0
    %382 = vmatpush1.msra.mxu0 0.0
    %383 = vmatprep.subr.mxu0 0.0
    %384 = vmatpush1.msra.mxu0 0.0
    %385 = vmatprep.subr.mxu0 0.0
    %386 = vmatpush1.msra.mxu0 0.0
    %387 = vmatprep.subr.mxu0 0.0
    %388 = vmatpush1.msra.mxu0 0.0
    %389 = vmatprep.subr.mxu0 0.0
    %390 = vmatpush1.msra.mxu0 0.0
    %391 = vmatprep.subr.mxu0 0.0
    %392 = vmatpush1.msra.mxu0 0.0
    %393 = vmatprep.subr.mxu0 0.0
    %394 = vmatpush1.msra.mxu0 0.0
    %395 = vmatprep.subr.mxu0 0.0
    %396 = vmatpush1.msra.mxu0 0.0
    %397 = vmatprep.subr.mxu0 0.0
    %398 = vmatpush1.msra.mxu0 0.0
    %399 = vmatprep.subr.mxu0 0.0
    %400 = vmatpush1.msra.mxu0 0.0
    %401 = vmatprep.subr.mxu0 0.0
    %402 = vmatpush1.msra.mxu0 0.0
    %403 = vmatprep.subr.mxu0 0.0
    %404 = vmatpush1.msra.mxu0 0.0
    %405 = vmatprep.subr.mxu0 0.0
    %406 = vmatpush1.msra.mxu0 0.0
    %407 = vmatprep.subr.mxu0 0.0
    %408 = vmatpush1.msra.mxu0 0.0
    %409 = vmatprep.subr.mxu0 0.0
    %410 = vmatpush1.msra.mxu0 0.0
    %411 = vmatprep.subr.mxu0 0.0
    %412 = vmatpush1.msra.mxu0 0.0
    %413 = vmatprep.subr.mxu0 0.0
    %414 = vmatpush1.msra.mxu0 0.0
    %415 = vmatprep.subr.mxu0 0.0
    %416 = vmatpush1.msra.mxu0 0.0
    %417 = vmatprep.subr.mxu0 0.0
    %418 = vmatpush1.msra.mxu0 0.0
    %419 = vmatprep.subr.mxu0 0.0
    %420 = vmatpush1.msra.mxu0 0.0
    %421 = vmatprep.subr.mxu0 0.0
    %422 = vmatpush1.msra.mxu0 0.0
    %423 = vmatprep.subr.mxu0 0.0
    %424 = vmatpush1.msra.mxu0 0.0
    %425 = vmatprep.subr.mxu0 0.0
    %426 = vmatpush1.msra.mxu0 0.0
    %427 = vmatprep.subr.mxu0 0.0
    %428 = vmatpush1.msra.mxu0 0.0
    %429 = vmatprep.subr.mxu0 0.0
    %430 = vmatpush1.msra.mxu0 0.0
    %431 = vmatprep.subr.mxu0 0.0
    %432 = vmatpush1.msra.mxu0 0.0
    %433 = vmatprep.subr.mxu0 0.0
    %434 = vmatpush1.msra.mxu0 0.0
    %435 = vmatprep.subr.mxu0 0.0
    %436 = vmatpush1.msra.mxu0 0.0
    %437 = vmatprep.subr.mxu0 0.0
    %438 = vmatpush1.msra.mxu0 0.0
    %439 = vmatprep.subr.mxu0 0.0
    %440 = vmatpush1.msra.mxu0 0.0
    %441 = vmatprep.mubr.f32.mxu0 0.0
    %442 = vmatmul.mubr.f32.gmra.mrb[0].mxu0 %v371
    %v443 = vpop.f32.mrb[0].mxu0
    %v444 = vadd.f32 %v367, %v443
    %v445 = vpop.f32.mrb[0].mxu0
    %446 = vdwg.mxu0
    %vm447 = vcmask 58368
    %448 = vst.msk [vmem:[#allocation2] sm:$0x3] %vm447, %v444
    // Predicated region
    $region38: #{dqn_forward.1} parent=1 // pred_check
      _
    $region39: #{dqn_forward.1} parent=1 // pred_check_branch
      %450 = sbr.rel (0) target = $region41
    $region40: #{dqn_forward.1} parent=1 // pred_region
      %s452 = ssub.s32 32, 32
      %453 = vsyncadd [#allocation3], %s452
      %s455 = sshll.u32 [#allocation2], 4
      %s456 = int_to_ptr.vmem [resolvable:$true] %s455
      %458 = dma.vmem_to_hbm [thread:$0]  %s456, 32, %s9, [#allocation3]
    $region41: #{dqn_forward.1} parent=1 // pred_fallthru
      _
    // Predicated region
    $region42: #{dqn_forward.1} parent=1 // pred_check
      _
    $region43: #{dqn_forward.1} parent=1 // pred_check_branch
      %460 = sbr.rel (0) target = $region45
    $region44: #{dqn_forward.1} parent=1 // pred_region
      %461 = dma.done [#allocation3], 32
    $region45: #{dqn_forward.1} parent=1 // pred_fallthru
      _
    %462 = vsyncpa [#allocation3], 1

</llo_original>
